<compile_context>
chip_gen: v7x
topology: tpu7x:2x2x1
jax: 0.10.0
libtpu: 0.0.40
codegen_flags: <defaults>
</compile_context>

<pallas_src>
import functools

import jax
import jax.numpy as jnp
from jax.experimental import pallas as pl
from jax.experimental.pallas import tpu as pltpu

LANE = 128      # lane width; for real shapes use 256-multiples for K on v6e/v7x
SUBLANE = 8


def _round_up(x, m):
    return ((x + m - 1) // m) * m


def base_model_kernel(ids_ref, emb_ref, wf_ref, bf_ref, out_ref, acc_ref, *,
                      counts_dtype):
    # ids_ref: [TB, S]  int32            (batch tile of token ids)
    # emb_ref: [TV, Ep] bf16             (vocab tile of the embedding table)
    # wf_ref:  [Ep, Cp] bf16             (fused (W1 @ W2) / S)
    # bf_ref:  [1,  Cp] f32              (fused bias b1 @ W2 + b2)
    # out_ref: [TB, Cp] f32
    # acc_ref: [TB, Ep] f32 scratch      (sum over vocab tiles of counts @ emb)
    vi = pl.program_id(1)
    n_v = pl.num_programs(1)
    TB, S = ids_ref.shape
    TV = emb_ref.shape[0]

    @pl.when(vi == 0)
    def _():
        acc_ref[...] = jnp.zeros_like(acc_ref)

    # counts[b, v] = #{s : ids[b, s] == v_base + v}, built without ever
    # materializing a [TB, S, TV] one-hot (live intermediate is only [TB, TV]).
    v_base = vi * TV
    vocab_iota = jax.lax.broadcasted_iota(jnp.int32, (TB, TV), 1) + v_base
    ids = ids_ref[...]                                        # [TB, S]
    counts = jnp.zeros((TB, TV), jnp.float32)
    for s in range(S):                                        # S is small & static
        counts = counts + (ids[:, s:s + 1] == vocab_iota).astype(jnp.float32)

    # Partial embedding-sum for this vocab tile (MXU, f32 accumulation).
    acc_ref[...] += jnp.dot(counts.astype(counts_dtype), emb_ref[...],
                            preferred_element_type=jnp.float32)

    # fc -> dropout(identity at eval) -> fc_out, as one matmul against the fused
    # weight (1/S already folded into wf), on the last vocab tile only.
    @pl.when(vi == n_v - 1)
    def _():
        out = jnp.dot(acc_ref[...].astype(jnp.bfloat16), wf_ref[...],
                      preferred_element_type=jnp.float32) + bf_ref[...]
        out_ref[...] = out.astype(out_ref.dtype)


def prepare_params(emb_table, w1, b1, w2, b2, seq_len, *, tv=LANE):
    """One-time weight prep (model init). Weights are stored transposed vs
    PyTorch: w1 = fc.weight.T [E, H], w2 = fc_out.weight.T [H, C]."""
    V, E = emb_table.shape
    C = w2.shape[1]
    Vp = _round_up(V, tv)
    Ep = _round_up(E, LANE)
    Cp = _round_up(C, LANE)

    # out = mean_s(emb[x]) @ W1 @ W2 + (b1 @ W2 + b2)
    #     = (sum_s emb[x]) @ [(W1 @ W2) / S] + (b1 @ W2 + b2)
    wf = jnp.dot(w1, w2) * (1.0 / seq_len)                    # [E, C]
    bf = jnp.dot(b1, w2) + b2                                 # [C]

    # Zero padding keeps the math exact; padded vocab rows contribute nothing.
    emb_p = jnp.zeros((Vp, Ep), jnp.float32).at[:V, :E].set(emb_table).astype(jnp.bfloat16)
    wf_p = jnp.zeros((Ep, Cp), jnp.float32).at[:E, :C].set(wf).astype(jnp.bfloat16)
    bf_p = jnp.zeros((1, Cp), jnp.float32).at[0, :C].set(bf)

    return dict(emb_p=emb_p, wf_p=wf_p, bf_p=bf_p,
                dims=dict(V=V, E=E, C=C, Vp=Vp, Ep=Ep, Cp=Cp, S=seq_len, TV=tv))


def base_model_forward(x_ids, params, *, tb=None):
    """x_ids: [B, S] int token ids; params from prepare_params (same seq_len)."""
    emb_p, wf_p, bf_p = params["emb_p"], params["wf_p"], params["bf_p"]
    d = params["dims"]
    B, S = x_ids.shape
    assert S == d["S"], "1/S was folded into the fused weight at prep time"

    TV, Vp, Ep, Cp, C = d["TV"], d["Vp"], d["Ep"], d["Cp"], d["C"]
    # Batch tile: sublane-aligned M so stores are unmasked and the MXU rows are
    # better used; at real batch sizes use TB=128+ and let the parallel batch
    # axis shard across v7x's two TensorCores.
    TB = tb if tb is not None else max(SUBLANE, _round_up(min(B, 128), SUBLANE))
    Bp = _round_up(B, TB)

    ids_p = jnp.zeros((Bp, S), jnp.int32).at[:B, :].set(x_ids.astype(jnp.int32))

    # bf16 represents integers exactly only up to 256; keep counts f32 beyond that.
    counts_dtype = jnp.bfloat16 if S <= 256 else jnp.float32
    kernel = functools.partial(base_model_kernel, counts_dtype=counts_dtype)

    grid = (Bp // TB, Vp // TV)   # batch parallel, vocab = reduction ("arbitrary")
    out_p = pl.pallas_call(
        kernel,
        out_shape=jax.ShapeDtypeStruct((Bp, Cp), jnp.float32),
        grid_spec=pltpu.PrefetchScalarGridSpec(
            num_scalar_prefetch=0,
            grid=grid,
            in_specs=[
                pl.BlockSpec((TB, S), lambda bi, vi: (bi, 0)),     # ids (2-D, no dummy lane dim)
                pl.BlockSpec((TV, Ep), lambda bi, vi: (vi, 0)),    # vocab tile of emb table
                pl.BlockSpec((Ep, Cp), lambda bi, vi: (0, 0)),     # fused weight (resident)
                pl.BlockSpec((1, Cp), lambda bi, vi: (0, 0)),      # fused bias
            ],
            out_specs=pl.BlockSpec((TB, Cp), lambda bi, vi: (bi, 0)),
            scratch_shapes=[pltpu.VMEM((TB, Ep), jnp.float32)],
        ),
        compiler_params=pltpu.CompilerParams(
            dimension_semantics=("parallel", "arbitrary"),
            # Tiles are tiny here; keep the limit modest so the same plan fits
            # v7x's 64 MiB VMEM as well as v5e/v6e's 128 MiB.
            vmem_limit_bytes=32 * 1024 * 1024,
        ),
    )(ids_p, emb_p, wf_p, bf_p)

    # Slice the padded batch rows / lane-padded class columns back off.
    return out_p[:B, :C]


if __name__ == "__main__":
    # Small, deterministic config consistent with the module's __init__.
    vocab_size = 100
    embed_dim = 32
    hidden_dim = 32
    num_classes = 8
    batch = 2
    seq = 8

    key = jax.random.PRNGKey(0)
    k_emb, k_w1, k_b1, k_w2, k_b2, k_x = jax.random.split(key, 6)

    # Deterministic synthetic parameters (shapes from nn.Embedding / nn.Linear).
    emb_table = jax.random.normal(k_emb, (vocab_size, embed_dim), jnp.float32) * 0.1
    w1 = jax.random.normal(k_w1, (embed_dim, hidden_dim), jnp.float32) * 0.1    # fc.weight^T
    b1 = jax.random.normal(k_b1, (hidden_dim,), jnp.float32) * 0.1              # fc.bias
    w2 = jax.random.normal(k_w2, (hidden_dim, num_classes), jnp.float32) * 0.1  # fc_out.weight^T
    b2 = jax.random.normal(k_b2, (num_classes,), jnp.float32) * 0.1             # fc_out.bias

    x_ids = jax.random.randint(k_x, (batch, seq), 0, vocab_size, jnp.int32)

    # One-time prep (hoisted out of the per-call path).
    params = prepare_params(emb_table, w1, b1, w2, b2, seq_len=seq)

    out = base_model_forward(x_ids, params)
    out = jax.block_until_ready(out)

    # Reference check in plain JAX (eval-mode forward).
    embed_ref = jnp.take(emb_table, x_ids, axis=0)
    avg_ref = jnp.mean(embed_ref, axis=1)
    ref = (avg_ref @ w1 + b1) @ w2 + b2
    assert out.shape == (batch, num_classes)
    max_err = float(jnp.max(jnp.abs(out - ref)))
    # Tolerance relaxed vs f32-exact: bf16 MXU operands + W1@W2 fusion reassociation.
    assert jnp.allclose(out, ref, atol=2e-2, rtol=2e-2), f"max abs diff = {max_err}"

    print("KERNEL_OK")
</pallas_src>

<mosaic_0001>
module attributes {stable_mosaic.version = 11 : i64} {
  func.func @base_model_kernel(%arg0: i32, %arg1: i32, %arg2: memref<8x8xi32, #tpu.memory_space<vmem>>, %arg3: memref<128x128xbf16, #tpu.memory_space<vmem>>, %arg4: memref<128x128xbf16, #tpu.memory_space<vmem>>, %arg5: memref<1x128xf32, #tpu.memory_space<vmem>>, %arg6: memref<8x128xf32, #tpu.memory_space<vmem>>, %arg7: memref<8x128xf32, #tpu.memory_space<vmem>>) attributes {dimension_semantics = [#tpu.dimension_semantics<parallel>, #tpu.dimension_semantics<arbitrary>], iteration_bounds = array<i64: 1, 1>, scalar_prefetch = 0 : i64, scratch_operands = 1 : i64, tpu.core_type = #tpu.core_type<tc>, window_params = [{transform_indices = @transform_0, window_bounds = array<i64: 8, 8>}, {transform_indices = @transform_1, window_bounds = array<i64: 128, 128>}, {pipeline_mode = #tpu.pipeline_mode<synchronous>, transform_indices = @transform_2, window_bounds = array<i64: 128, 128>}, {pipeline_mode = #tpu.pipeline_mode<synchronous>, transform_indices = @transform_3, window_bounds = array<i64: 1, 128>}, {transform_indices = @transform_4, window_bounds = array<i64: 8, 128>}]} {
    %c0_i32 = arith.constant 0 : i32
    %0 = arith.cmpi eq, %arg1, %c0_i32 : i32
    %1 = arith.extui %0 : i1 to i32
    %c0_i32_0 = arith.constant 0 : i32
    %2 = arith.cmpi ne, %1, %c0_i32_0 : i32
    scf.if %2 {
      %cst_11 = arith.constant 0.000000e+00 : f32
      %66 = vector.broadcast %cst_11 : f32 to vector<8x128xf32>
      %c0_12 = arith.constant 0 : index
      %c0_13 = arith.constant 0 : index
      %67 = vector.load %arg7[%c0_12, %c0_13] : memref<8x128xf32, #tpu.memory_space<vmem>>, vector<8x128xf32>
      tpu.vector_store %arg7[%c0_12, %c0_13], %66 {strides = array<i32>} : memref<8x128xf32, #tpu.memory_space<vmem>>, vector<8x128xf32>,
    } else {
    }
    %c128_i32 = arith.constant 128 : i32
    %3 = arith.muli %arg1, %c128_i32 : i32
    %4 = tpu.iota {dimensions = array<i32: 1>} : vector<8x128xi32>
    %5 = vector.broadcast %3 : i32 to vector<8x128xi32>
    %6 = arith.addi %4, %5 : vector<8x128xi32>
    %c0 = arith.constant 0 : index
    %c0_1 = arith.constant 0 : index
    %7 = vector.load %arg2[%c0, %c0_1] : memref<8x8xi32, #tpu.memory_space<vmem>>, vector<8x8xi32>
    %cst = arith.constant 0.000000e+00 : f32
    %8 = vector.broadcast %cst : f32 to vector<8x128xf32>
    %9 = vector.extract_strided_slice %7 {offsets = [0, 0], sizes = [8, 1], strides = [1, 1]} : vector<8x8xi32> to vector<8x1xi32>
    %10 = vector.broadcast %9 : vector<8x1xi32> to vector<8x128xi32>
    %11 = arith.cmpi eq, %10, %6 : vector<8x128xi32>
    %12 = arith.extui %11 : vector<8x128xi1> to vector<8x128xi32>
    %13 = arith.sitofp %12 : vector<8x128xi32> to vector<8x128xf32>
    %14 = arith.addf %8, %13 : vector<8x128xf32>
    %15 = vector.extract_strided_slice %7 {offsets = [0, 1], sizes = [8, 1], strides = [1, 1]} : vector<8x8xi32> to vector<8x1xi32>
    %16 = vector.broadcast %15 : vector<8x1xi32> to vector<8x128xi32>
    %17 = arith.cmpi eq, %16, %6 : vector<8x128xi32>
    %18 = arith.extui %17 : vector<8x128xi1> to vector<8x128xi32>
    %19 = arith.sitofp %18 : vector<8x128xi32> to vector<8x128xf32>
    %20 = arith.addf %14, %19 : vector<8x128xf32>
    %21 = vector.extract_strided_slice %7 {offsets = [0, 2], sizes = [8, 1], strides = [1, 1]} : vector<8x8xi32> to vector<8x1xi32>
    %22 = vector.broadcast %21 : vector<8x1xi32> to vector<8x128xi32>
    %23 = arith.cmpi eq, %22, %6 : vector<8x128xi32>
    %24 = arith.extui %23 : vector<8x128xi1> to vector<8x128xi32>
    %25 = arith.sitofp %24 : vector<8x128xi32> to vector<8x128xf32>
    %26 = arith.addf %20, %25 : vector<8x128xf32>
    %27 = vector.extract_strided_slice %7 {offsets = [0, 3], sizes = [8, 1], strides = [1, 1]} : vector<8x8xi32> to vector<8x1xi32>
    %28 = vector.broadcast %27 : vector<8x1xi32> to vector<8x128xi32>
    %29 = arith.cmpi eq, %28, %6 : vector<8x128xi32>
    %30 = arith.extui %29 : vector<8x128xi1> to vector<8x128xi32>
    %31 = arith.sitofp %30 : vector<8x128xi32> to vector<8x128xf32>
    %32 = arith.addf %26, %31 : vector<8x128xf32>
    %33 = vector.extract_strided_slice %7 {offsets = [0, 4], sizes = [8, 1], strides = [1, 1]} : vector<8x8xi32> to vector<8x1xi32>
    %34 = vector.broadcast %33 : vector<8x1xi32> to vector<8x128xi32>
    %35 = arith.cmpi eq, %34, %6 : vector<8x128xi32>
    %36 = arith.extui %35 : vector<8x128xi1> to vector<8x128xi32>
    %37 = arith.sitofp %36 : vector<8x128xi32> to vector<8x128xf32>
    %38 = arith.addf %32, %37 : vector<8x128xf32>
    %39 = vector.extract_strided_slice %7 {offsets = [0, 5], sizes = [8, 1], strides = [1, 1]} : vector<8x8xi32> to vector<8x1xi32>
    %40 = vector.broadcast %39 : vector<8x1xi32> to vector<8x128xi32>
    %41 = arith.cmpi eq, %40, %6 : vector<8x128xi32>
    %42 = arith.extui %41 : vector<8x128xi1> to vector<8x128xi32>
    %43 = arith.sitofp %42 : vector<8x128xi32> to vector<8x128xf32>
    %44 = arith.addf %38, %43 : vector<8x128xf32>
    %45 = vector.extract_strided_slice %7 {offsets = [0, 6], sizes = [8, 1], strides = [1, 1]} : vector<8x8xi32> to vector<8x1xi32>
    %46 = vector.broadcast %45 : vector<8x1xi32> to vector<8x128xi32>
    %47 = arith.cmpi eq, %46, %6 : vector<8x128xi32>
    %48 = arith.extui %47 : vector<8x128xi1> to vector<8x128xi32>
    %49 = arith.sitofp %48 : vector<8x128xi32> to vector<8x128xf32>
    %50 = arith.addf %44, %49 : vector<8x128xf32>
    %51 = vector.extract_strided_slice %7 {offsets = [0, 7], sizes = [8, 1], strides = [1, 1]} : vector<8x8xi32> to vector<8x1xi32>
    %52 = vector.broadcast %51 : vector<8x1xi32> to vector<8x128xi32>
    %53 = arith.cmpi eq, %52, %6 : vector<8x128xi32>
    %54 = arith.extui %53 : vector<8x128xi1> to vector<8x128xi32>
    %55 = arith.sitofp %54 : vector<8x128xi32> to vector<8x128xf32>
    %56 = arith.addf %50, %55 : vector<8x128xf32>
    %c0_2 = arith.constant 0 : index
    %c0_3 = arith.constant 0 : index
    %57 = vector.load %arg7[%c0_2, %c0_3] : memref<8x128xf32, #tpu.memory_space<vmem>>, vector<8x128xf32>
    %58 = arith.truncf %56 : vector<8x128xf32> to vector<8x128xbf16>
    %c0_4 = arith.constant 0 : index
    %c0_5 = arith.constant 0 : index
    %59 = vector.load %arg3[%c0_4, %c0_5] : memref<128x128xbf16, #tpu.memory_space<vmem>>, vector<128x128xbf16>
    %cst_6 = arith.constant dense<0.000000e+00> : vector<8x128xf32>
    %60 = tpu.matmul %58, %59, %cst_6 {dimension_numbers = #tpu.dot_dimension_numbers<[1], [0], [0], [1], [0, 0, 1, 1], [], []>} : vector<8x128xbf16>, vector<128x128xbf16>, vector<8x128xf32> -> vector<8x128xf32>
    %61 = arith.addf %57, %60 : vector<8x128xf32>
    %c0_7 = arith.constant 0 : index
    %c0_8 = arith.constant 0 : index
    %62 = vector.load %arg7[%c0_7, %c0_8] : memref<8x128xf32, #tpu.memory_space<vmem>>, vector<8x128xf32>
    tpu.vector_store %arg7[%c0_7, %c0_8], %61 {strides = array<i32>} : memref<8x128xf32, #tpu.memory_space<vmem>>, vector<8x128xf32>,
    %c0_i32_9 = arith.constant 0 : i32
    %63 = arith.cmpi eq, %arg1, %c0_i32_9 : i32
    %64 = arith.extui %63 : i1 to i32
    %c0_i32_10 = arith.constant 0 : i32
    %65 = arith.cmpi ne, %64, %c0_i32_10 : i32
    scf.if %65 {
      %c0_11 = arith.constant 0 : index
      %c0_12 = arith.constant 0 : index
      %66 = vector.load %arg7[%c0_11, %c0_12] : memref<8x128xf32, #tpu.memory_space<vmem>>, vector<8x128xf32>
      %67 = arith.truncf %66 : vector<8x128xf32> to vector<8x128xbf16>
      %c0_13 = arith.constant 0 : index
      %c0_14 = arith.constant 0 : index
      %68 = vector.load %arg4[%c0_13, %c0_14] : memref<128x128xbf16, #tpu.memory_space<vmem>>, vector<128x128xbf16>
      %cst_15 = arith.constant dense<0.000000e+00> : vector<8x128xf32>
      %69 = tpu.matmul %67, %68, %cst_15 {dimension_numbers = #tpu.dot_dimension_numbers<[1], [0], [0], [1], [0, 0, 1, 1], [], []>} : vector<8x128xbf16>, vector<128x128xbf16>, vector<8x128xf32> -> vector<8x128xf32>
      %c0_16 = arith.constant 0 : index
      %c0_17 = arith.constant 0 : index
      %70 = vector.load %arg5[%c0_16, %c0_17] : memref<1x128xf32, #tpu.memory_space<vmem>>, vector<1x128xf32>
      %71 = vector.broadcast %70 : vector<1x128xf32> to vector<8x128xf32>
      %72 = arith.addf %69, %71 : vector<8x128xf32>
      %c0_18 = arith.constant 0 : index
      %c0_19 = arith.constant 0 : index
      %73 = vector.load %arg6[%c0_18, %c0_19] : memref<8x128xf32, #tpu.memory_space<vmem>>, vector<8x128xf32>
      tpu.vector_store %arg6[%c0_18, %c0_19], %72 {strides = array<i32>} : memref<8x128xf32, #tpu.memory_space<vmem>>, vector<8x128xf32>,
    } else {
    }
    return
  }
  func.func @transform_0(%arg0: i32, %arg1: i32) -> (i32, i32) {
    %c0_i32 = arith.constant 0 : i32
    %c0_i32_0 = arith.constant 0 : i32
    return %arg0, %c0_i32 : i32, i32
  }
  func.func @transform_1(%arg0: i32, %arg1: i32) -> (i32, i32) {
    %c0_i32 = arith.constant 0 : i32
    %c0_i32_0 = arith.constant 0 : i32
    return %arg1, %c0_i32 : i32, i32
  }
  func.func @transform_2(%arg0: i32, %arg1: i32) -> (i32, i32) {
    %c0_i32 = arith.constant 0 : i32
    %c0_i32_0 = arith.constant 0 : i32
    %c0_i32_1 = arith.constant 0 : i32
    return %c0_i32, %c0_i32_0 : i32, i32
  }
  func.func @transform_3(%arg0: i32, %arg1: i32) -> (i32, i32) {
    %c0_i32 = arith.constant 0 : i32
    %c0_i32_0 = arith.constant 0 : i32
    %c0_i32_1 = arith.constant 0 : i32
    return %c0_i32, %c0_i32_0 : i32, i32
  }
  func.func @transform_4(%arg0: i32, %arg1: i32) -> (i32, i32) {
    %c0_i32 = arith.constant 0 : i32
    %c0_i32_0 = arith.constant 0 : i32
    return %arg0, %c0_i32 : i32, i32
  }
}

</mosaic_0001>

<llo_original>
// kernel: tpu_custom_call.1
$region0: #{tpu_custom_call.1}
  #allocation0 [shape = 'u32[]', space=smem, size = 0x4, offset = 0x4, fixed_abs, tag = 'smem constant byte address 0x4 - core index']
  #allocation1 [shape = 'u32[144,128]{1,0:T(1,128)}', space=vmem, size = 0x12000, scoped, tag = 'internal scratch']
  #allocation2 [shape = 'f32[8,128]{1,0:T(8,128)}', space=vmem, size = 0x1000, scoped, tag = 'scratch operand']
  %s0 = inlined_call_operand.hbm [shape: s32[8,8], index: 0, kind: input, shape index: {}]
  %s1 = inlined_call_operand.hbm [shape: bf16[128,128], index: 1, kind: input, shape index: {}]
  %s2 = inlined_call_operand.hbm [shape: bf16[128,128], index: 2, kind: input, shape index: {}]
  %s3 = inlined_call_operand.vmem [shape: f32[1,128], index: 3, kind: input, shape index: {}]
  %s4 = inlined_call_operand.hbm [shape: f32[8,128], index: 4, kind: output, shape index: {}]
  %s5 = sld [smem:[#allocation0]]
  $region46: #{tpu_custom_call.1} parent=0
    _
  %s7 = ssub.s32 1, %s5
  %s8 = scalar_select 0, %s7, %s5
  $region1: #{tpu_custom_call.1} parent=0
    #allocation3 [shape = 'u8[4096]{0}', space=vmem, size = 0x1000, scoped, tag = 'input window, operand 0, single buffered']
    #allocation4 [shape = 's32[1]{0}', space=sflag, size = 0x4, scoped, tag = 'scoped memory for tpu_custom_call.1']
    #allocation5 [shape = 's32[1]{0}', space=sflag, size = 0x4, scoped, tag = 'scoped memory for tpu_custom_call.1']
    #allocation6 [shape = 'u8[32768]{0}', space=vmem, size = 0x8000, scoped, tag = 'input window, operand 1, single buffered']
    #allocation7 [shape = 's32[1]{0}', space=sflag, size = 0x4, scoped, tag = 'scoped memory for tpu_custom_call.1']
    #allocation8 [shape = 'u8[32768]{0}', space=vmem, size = 0x8000, scoped, tag = 'input window, operand 2, single buffered']
    #allocation9 [shape = 'u8[4096]{0}', space=vmem, size = 0x1000, scoped, tag = 'output window, operand 0, single buffered']
    %9 = vsyncpa [#allocation4], 0
    %10 = vsyncpa [#allocation7], 0
    %11 = vsyncpa [#allocation5], 0
    // Predicated region
    $region2: #{tpu_custom_call.1} parent=1 // pred_check
      _
    $region3: #{tpu_custom_call.1} parent=1 // pred_check_branch
      %13 = sbr.rel (0) target = $region5
    $region4: #{tpu_custom_call.1} parent=1 // pred_region
      %s15 = ssub.s32 128, 128
      %16 = vsyncadd [#allocation4], %s15
      %s18 = sshll.u32 [#allocation3], 4
      %s19 = int_to_ptr.vmem [resolvable:$true] %s18
      %21 = dma.hbm_to_vmem [thread:$0]  %s0, 128, %s19, [#allocation4]
    $region5: #{tpu_custom_call.1} parent=1 // pred_fallthru
      _
    // Predicated region
    $region6: #{tpu_custom_call.1} parent=1 // pred_check
      _
    $region7: #{tpu_custom_call.1} parent=1 // pred_check_branch
      %23 = sbr.rel (0) target = $region9
    $region8: #{tpu_custom_call.1} parent=1 // pred_region
      %s25 = ssub.s32 1024, 1024
      %26 = vsyncadd [#allocation7], %s25
      %s27 = sshll.u32 [#allocation6], 4
      %s28 = int_to_ptr.vmem [resolvable:$true] %s27
      %33 = dma.hbm_to_vmem [thread:$0]  %s1, 1024, %s28, [#allocation7], 64, 64, 4
    $region9: #{tpu_custom_call.1} parent=1 // pred_fallthru
      _
    // Predicated region
    $region10: #{tpu_custom_call.1} parent=1 // pred_check
      _
    $region11: #{tpu_custom_call.1} parent=1 // pred_check_branch
      %35 = sbr.rel (0) target = $region13
    $region12: #{tpu_custom_call.1} parent=1 // pred_region
      %s37 = ssub.s32 1024, 1024
      %38 = vsyncadd [#allocation7], %s37
      %s39 = sshll.u32 [#allocation8], 4
      %s40 = int_to_ptr.vmem [resolvable:$true] %s39
      %45 = dma.hbm_to_vmem [thread:$0]  %s2, 1024, %s40, [#allocation7], 64, 64, 4
    $region13: #{tpu_custom_call.1} parent=1 // pred_fallthru
      _
    // Predicated region
    $region14: #{tpu_custom_call.1} parent=1 // pred_check
      _
    $region15: #{tpu_custom_call.1} parent=1 // pred_check_branch
      %47 = sbr.rel (0) target = $region17
    $region16: #{tpu_custom_call.1} parent=1 // pred_region
      _
    $region17: #{tpu_custom_call.1} parent=1 // pred_fallthru
      _
    // Predicated region
    $region18: #{tpu_custom_call.1} parent=1 // pred_check
      _
    $region19: #{tpu_custom_call.1} parent=1 // pred_check_branch
      %49 = sbr.rel (0) target = $region21
    $region20: #{tpu_custom_call.1} parent=1 // pred_region
      %50 = dma.done [#allocation4], 128
    $region21: #{tpu_custom_call.1} parent=1 // pred_fallthru
      _
    // Predicated region
    $region22: #{tpu_custom_call.1} parent=1 // pred_check
      _
    $region23: #{tpu_custom_call.1} parent=1 // pred_check_branch
      %52 = sbr.rel (0) target = $region25
    $region24: #{tpu_custom_call.1} parent=1 // pred_region
      %53 = dma.done [#allocation7], 1024
    $region25: #{tpu_custom_call.1} parent=1 // pred_fallthru
      _
    // Predicated region
    $region26: #{tpu_custom_call.1} parent=1 // pred_check
      _
    $region27: #{tpu_custom_call.1} parent=1 // pred_check_branch
      %55 = sbr.rel (0) target = $region29
    $region28: #{tpu_custom_call.1} parent=1 // pred_region
      %56 = dma.done [#allocation7], 1024
    $region29: #{tpu_custom_call.1} parent=1 // pred_fallthru
      _
    %p58 = scmp.eq.s32.totalorder 0, 0
    // Predicated region
    $region30: #{tpu_custom_call.1} parent=1 // pred_check
      %p59 = pneg %p58
    $region31: #{tpu_custom_call.1} parent=1 // pred_check_branch
      %61 = sbr.rel (%p59) target = $region33
    $region32: #{tpu_custom_call.1} parent=1 // pred_region
      %62 = vst [vmem:[#allocation2] sm:$0xff] 0.0
    $region33: #{tpu_custom_call.1} parent=1 // pred_fallthru
      _
    %s63 = smul.u32 0, 128
    %v64 = vlaneseq
    %v65 = vand.u32 %v64, 127
    %v66 = vstv %s63
    %v67 = vadd.s32 %v65, %v66
    %v68 = vld [vmem:[#allocation3] sm:$0xff]
    %69 = vset.pattern.permute.xlu0 0
    %70 = vperm.xlu0 %69, %v68
    %v71 = vpop.permute.xlu0 %70
    %vm72 = vcmp.eq.s32.totalorder %v71, %v67
    %v73 = vsel %vm72, 1, 0
    %v74 = vcvt.s32.f32 %v73
    %v75 = vadd.f32 %v74, 0.0
    %76 = vset.pattern.permute.xlu0 1
    %77 = vperm.xlu0 %76, %v68
    %v78 = vpop.permute.xlu0 %77
    %vm79 = vcmp.eq.s32.totalorder %v78, %v67
    %v80 = vsel %vm79, 1, 0
    %v81 = vcvt.s32.f32 %v80
    %v82 = vadd.f32 %v75, %v81
    %83 = vset.pattern.permute.xlu0 2
    %84 = vperm.xlu0 %83, %v68
    %v85 = vpop.permute.xlu0 %84
    %vm86 = vcmp.eq.s32.totalorder %v85, %v67
    %v87 = vsel %vm86, 1, 0
    %v88 = vcvt.s32.f32 %v87
    %v89 = vadd.f32 %v82, %v88
    %90 = vset.pattern.permute.xlu0 3
    %91 = vperm.xlu0 %90, %v68
    %v92 = vpop.permute.xlu0 %91
    %vm93 = vcmp.eq.s32.totalorder %v92, %v67
    %v94 = vsel %vm93, 1, 0
    %v95 = vcvt.s32.f32 %v94
    %v96 = vadd.f32 %v89, %v95
    %97 = vset.pattern.permute.xlu0 4
    %98 = vperm.xlu0 %97, %v68
    %v99 = vpop.permute.xlu0 %98
    %vm100 = vcmp.eq.s32.totalorder %v99, %v67
    %v101 = vsel %vm100, 1, 0
    %v102 = vcvt.s32.f32 %v101
    %v103 = vadd.f32 %v96, %v102
    %104 = vset.pattern.permute.xlu0 5
    %105 = vperm.xlu0 %104, %v68
    %v106 = vpop.permute.xlu0 %105
    %vm107 = vcmp.eq.s32.totalorder %v106, %v67
    %v108 = vsel %vm107, 1, 0
    %v109 = vcvt.s32.f32 %v108
    %v110 = vadd.f32 %v103, %v109
    %111 = vset.pattern.permute.xlu0 6
    %112 = vperm.xlu0 %111, %v68
    %v113 = vpop.permute.xlu0 %112
    %vm114 = vcmp.eq.s32.totalorder %v113, %v67
    %v115 = vsel %vm114, 1, 0
    %v116 = vcvt.s32.f32 %v115
    %v117 = vadd.f32 %v110, %v116
    %118 = vset.pattern.permute.xlu0 7
    %119 = vperm.xlu0 %118, %v68
    %v120 = vpop.permute.xlu0 %119
    %vm121 = vcmp.eq.s32.totalorder %v120, %v67
    %v122 = vsel %vm121, 1, 0
    %v123 = vcvt.s32.f32 %v122
    %v124 = vadd.f32 %v117, %v123
    %v125 = vld [vmem:[#allocation2] sm:$0xff]
    %v126 = vpack.c.bf16 %v124, %v124
    %v127 = vld [vmem:[#allocation6] sm:$0xf]
    %v128 = vld [vmem:[#allocation6 + $0x4] sm:$0xf]
    %v129 = vld [vmem:[#allocation6 + $0x8] sm:$0xf]
    %v130 = vld [vmem:[#allocation6 + $0xc] sm:$0xf]
    %v131 = vld [vmem:[#allocation6 + $0x10] sm:$0xf]
    %v132 = vld [vmem:[#allocation6 + $0x14] sm:$0xf]
    %v133 = vld [vmem:[#allocation6 + $0x18] sm:$0xf]
    %v134 = vld [vmem:[#allocation6 + $0x1c] sm:$0xf]
    %v135 = vld [vmem:[#allocation6 + $0x20] sm:$0xf]
    %v136 = vld [vmem:[#allocation6 + $0x24] sm:$0xf]
    %v137 = vld [vmem:[#allocation6 + $0x28] sm:$0xf]
    %v138 = vld [vmem:[#allocation6 + $0x2c] sm:$0xf]
    %v139 = vld [vmem:[#allocation6 + $0x30] sm:$0xf]
    %v140 = vld [vmem:[#allocation6 + $0x34] sm:$0xf]
    %v141 = vld [vmem:[#allocation6 + $0x38] sm:$0xf]
    %v142 = vld [vmem:[#allocation6 + $0x3c] sm:$0xf]
    %v159 = vunpack.c.l.b16 %v127
    %v160 = vunpack.c.l.b16 %v128
    %v161 = vunpack.c.l.b16 %v129
    %v162 = vunpack.c.l.b16 %v130
    %v163 = vunpack.c.l.b16 %v131
    %v164 = vunpack.c.l.b16 %v132
    %v165 = vunpack.c.l.b16 %v133
    %v166 = vunpack.c.l.b16 %v134
    %v167 = vunpack.c.l.b16 %v135
    %v168 = vunpack.c.l.b16 %v136
    %v169 = vunpack.c.l.b16 %v137
    %v170 = vunpack.c.l.b16 %v138
    %v171 = vunpack.c.l.b16 %v139
    %v172 = vunpack.c.l.b16 %v140
    %v173 = vunpack.c.l.b16 %v141
    %v174 = vunpack.c.l.b16 %v142
    %v175 = vpack.c.b16 %v160, %v159
    %v176 = vpack.c.b16 %v162, %v161
    %v177 = vpack.c.b16 %v164, %v163
    %v178 = vpack.c.b16 %v166, %v165
    %v179 = vpack.c.b16 %v168, %v167
    %v180 = vpack.c.b16 %v170, %v169
    %v181 = vpack.c.b16 %v172, %v171
    %v182 = vpack.c.b16 %v174, %v173
    %191 = vmatprep.subr.bf16.mxu0 0
    %192 = vmatpush1.bf16.msra.mxu0 %v175
    %193 = vmatprep.subr.bf16.mxu0 0
    %194 = vmatpush1.bf16.msra.mxu0 %v176
    %195 = vmatprep.subr.bf16.mxu0 0
    %196 = vmatpush1.bf16.msra.mxu0 %v177
    %197 = vmatprep.subr.bf16.mxu0 0
    %198 = vmatpush1.bf16.msra.mxu0 %v178
    %199 = vmatprep.subr.bf16.mxu0 0
    %200 = vmatpush1.bf16.msra.mxu0 %v179
    %201 = vmatprep.subr.bf16.mxu0 0
    %202 = vmatpush1.bf16.msra.mxu0 %v180
    %203 = vmatprep.subr.bf16.mxu0 0
    %204 = vmatpush1.bf16.msra.mxu0 %v181
    %205 = vmatprep.subr.bf16.mxu0 0
    %206 = vmatpush1.bf16.msra.mxu0 %v182
    %207 = vmatprep.subr.bf16.mxu0 0
    %208 = vmatpush1.bf16.msra.mxu0 0
    %209 = vmatprep.subr.bf16.mxu0 0
    %210 = vmatpush1.bf16.msra.mxu0 0
    %211 = vmatprep.subr.bf16.mxu0 0
    %212 = vmatpush1.bf16.msra.mxu0 0
    %213 = vmatprep.subr.bf16.mxu0 0
    %214 = vmatpush1.bf16.msra.mxu0 0
    %215 = vmatprep.subr.bf16.mxu0 0
    %216 = vmatpush1.bf16.msra.mxu0 0
    %217 = vmatprep.subr.bf16.mxu0 0
    %218 = vmatpush1.bf16.msra.mxu0 0
    %219 = vmatprep.subr.bf16.mxu0 0
    %220 = vmatpush1.bf16.msra.mxu0 0
    %221 = vmatprep.subr.bf16.mxu0 0
    %222 = vmatpush1.bf16.msra.mxu0 0
    %223 = vmatprep.mubr.bf16.mxu0 0
    %224 = vmatmul.mubr.bf16.gmra.mrb[0].mxu0 %v126
    %v225 = vpop.f32.mrb[0].mxu0
    %v226 = vadd.f32 0.0, %v225
    %v227 = vpop.f32.mrb[0].mxu0
    %v228 = vpop.f32.mrb[0].mxu0
    %v229 = vpop.f32.mrb[0].mxu0
    %230 = vdwg.mxu0
    %v231 = vadd.f32 %v125, %v226
    %232 = vst [vmem:[#allocation2] sm:$0xff] %v231
    // Predicated region
    $region34: #{tpu_custom_call.1} parent=1 // pred_check
      %p233 = pneg %p58
    $region35: #{tpu_custom_call.1} parent=1 // pred_check_branch
      %235 = sbr.rel (%p233) target = $region37
    $region36: #{tpu_custom_call.1} parent=1 // pred_region
      %v236 = vld [vmem:[#allocation2] sm:$0xff]
      %v237 = vpack.c.bf16 %v236, %v236
      %v238 = vld [vmem:[#allocation8] sm:$0xf]
      %v239 = vld [vmem:[#allocation8 + $0x4] sm:$0xf]
      %v240 = vld [vmem:[#allocation8 + $0x8] sm:$0xf]
      %v241 = vld [vmem:[#allocation8 + $0xc] sm:$0xf]
      %v242 = vld [vmem:[#allocation8 + $0x10] sm:$0xf]
      %v243 = vld [vmem:[#allocation8 + $0x14] sm:$0xf]
      %v244 = vld [vmem:[#allocation8 + $0x18] sm:$0xf]
      %v245 = vld [vmem:[#allocation8 + $0x1c] sm:$0xf]
      %v246 = vld [vmem:[#allocation8 + $0x20] sm:$0xf]
      %v247 = vld [vmem:[#allocation8 + $0x24] sm:$0xf]
      %v248 = vld [vmem:[#allocation8 + $0x28] sm:$0xf]
      %v249 = vld [vmem:[#allocation8 + $0x2c] sm:$0xf]
      %v250 = vld [vmem:[#allocation8 + $0x30] sm:$0xf]
      %v251 = vld [vmem:[#allocation8 + $0x34] sm:$0xf]
      %v252 = vld [vmem:[#allocation8 + $0x38] sm:$0xf]
      %v253 = vld [vmem:[#allocation8 + $0x3c] sm:$0xf]
      %v254 = vld [vmem:[%s3] sm:$0x1]
      %v256 = vlaneseq
      %v257 = vshrl.u32 %v256, 7
      %v258 = vsub.s32 0, %v257
      %v259 = vrot.slane %v254, %v258
      %v277 = vunpack.c.l.b16 %v238
      %v278 = vunpack.c.l.b16 %v239
      %v279 = vunpack.c.l.b16 %v240
      %v280 = vunpack.c.l.b16 %v241
      %v281 = vunpack.c.l.b16 %v242
      %v282 = vunpack.c.l.b16 %v243
      %v283 = vunpack.c.l.b16 %v244
      %v284 = vunpack.c.l.b16 %v245
      %v285 = vunpack.c.l.b16 %v246
      %v286 = vunpack.c.l.b16 %v247
      %v287 = vunpack.c.l.b16 %v248
      %v288 = vunpack.c.l.b16 %v249
      %v289 = vunpack.c.l.b16 %v250
      %v290 = vunpack.c.l.b16 %v251
      %v291 = vunpack.c.l.b16 %v252
      %v292 = vunpack.c.l.b16 %v253
      %v293 = vpack.c.b16 %v278, %v277
      %v294 = vpack.c.b16 %v280, %v279
      %v295 = vpack.c.b16 %v282, %v281
      %v296 = vpack.c.b16 %v284, %v283
      %v297 = vpack.c.b16 %v286, %v285
      %v298 = vpack.c.b16 %v288, %v287
      %v299 = vpack.c.b16 %v290, %v289
      %v300 = vpack.c.b16 %v292, %v291
      %309 = vmatprep.subr.bf16.mxu0 0
      %310 = vmatpush1.bf16.msra.mxu0 %v293
      %311 = vmatprep.subr.bf16.mxu0 0
      %312 = vmatpush1.bf16.msra.mxu0 %v294
      %313 = vmatprep.subr.bf16.mxu0 0
      %314 = vmatpush1.bf16.msra.mxu0 %v295
      %315 = vmatprep.subr.bf16.mxu0 0
      %316 = vmatpush1.bf16.msra.mxu0 %v296
      %317 = vmatprep.subr.bf16.mxu0 0
      %318 = vmatpush1.bf16.msra.mxu0 %v297
      %319 = vmatprep.subr.bf16.mxu0 0
      %320 = vmatpush1.bf16.msra.mxu0 %v298
      %321 = vmatprep.subr.bf16.mxu0 0
      %322 = vmatpush1.bf16.msra.mxu0 %v299
      %323 = vmatprep.subr.bf16.mxu0 0
      %324 = vmatpush1.bf16.msra.mxu0 %v300
      %325 = vmatprep.subr.bf16.mxu0 0
      %326 = vmatpush1.bf16.msra.mxu0 0
      %327 = vmatprep.subr.bf16.mxu0 0
      %328 = vmatpush1.bf16.msra.mxu0 0
      %329 = vmatprep.subr.bf16.mxu0 0
      %330 = vmatpush1.bf16.msra.mxu0 0
      %331 = vmatprep.subr.bf16.mxu0 0
      %332 = vmatpush1.bf16.msra.mxu0 0
      %333 = vmatprep.subr.bf16.mxu0 0
      %334 = vmatpush1.bf16.msra.mxu0 0
      %335 = vmatprep.subr.bf16.mxu0 0
      %336 = vmatpush1.bf16.msra.mxu0 0
      %337 = vmatprep.subr.bf16.mxu0 0
      %338 = vmatpush1.bf16.msra.mxu0 0
      %339 = vmatprep.subr.bf16.mxu0 0
      %340 = vmatpush1.bf16.msra.mxu0 0
      %341 = vmatprep.mubr.bf16.mxu0 0
      %342 = vmatmul.mubr.bf16.gmra.mrb[0].mxu0 %v237
      %v343 = vpop.f32.mrb[0].mxu0
      %v344 = vadd.f32 %v259, %v343
      %v345 = vpop.f32.mrb[0].mxu0
      %v346 = vpop.f32.mrb[0].mxu0
      %v347 = vpop.f32.mrb[0].mxu0
      %348 = vdwg.mxu0
      %349 = vst [vmem:[#allocation9] sm:$0xff] %v344
    $region37: #{tpu_custom_call.1} parent=1 // pred_fallthru
      _
    // Predicated region
    $region38: #{tpu_custom_call.1} parent=1 // pred_check
      _
    $region39: #{tpu_custom_call.1} parent=1 // pred_check_branch
      %351 = sbr.rel (0) target = $region41
    $region40: #{tpu_custom_call.1} parent=1 // pred_region
      %s353 = ssub.s32 128, 128
      %354 = vsyncadd [#allocation5], %s353
      %s356 = sshll.u32 [#allocation9], 4
      %s357 = int_to_ptr.vmem [resolvable:$true] %s356
      %359 = dma.vmem_to_hbm [thread:$0]  %s357, 128, %s4, [#allocation5]
    $region41: #{tpu_custom_call.1} parent=1 // pred_fallthru
      _
    // Predicated region
    $region42: #{tpu_custom_call.1} parent=1 // pred_check
      _
    $region43: #{tpu_custom_call.1} parent=1 // pred_check_branch
      %361 = sbr.rel (0) target = $region45
    $region44: #{tpu_custom_call.1} parent=1 // pred_region
      %362 = dma.done [#allocation5], 128
    $region45: #{tpu_custom_call.1} parent=1 // pred_fallthru
      _
    %363 = vsyncpa [#allocation4], 1
    %364 = vsyncpa [#allocation7], 1
    %365 = vsyncpa [#allocation5], 1

</llo_original>
